<compile_context>
chip_gen: v5e
topology: v5e:2x2
jax: 0.10.0
libtpu: 0.0.40
codegen_flags: <defaults>
</compile_context>

<pallas_src>
import functools
import math

import jax
import jax.numpy as jnp
from jax import lax
from jax.experimental import pallas as pl
from jax.experimental.pallas import tpu as pltpu


def _round_up(x, m):
    return ((x + m - 1) // m) * m


def _sublane_multiple(dtype):
    # Packed-sublane layout rules: 4-byte -> 8, 2-byte -> 16, 1-byte -> 32.
    return {4: 8, 2: 16, 1: 32}.get(jnp.dtype(dtype).itemsize, 8)


def _contrastive_loss_kernel(x0_ref, x1_ref, lbl_ref, out_ref, *,
                             margin, dist_flag, n_valid, tile_n, need_mask):
    x0 = x0_ref[...].astype(jnp.float32)      # (tile_n, D)
    x1 = x1_ref[...].astype(jnp.float32)      # (tile_n, D)
    lbl = lbl_ref[...]                        # (tile_n, 1) f32

    if dist_flag == "l2":
        diff = x0 - x1 + 1e-6                 # F.pairwise_distance eps
        sq = jnp.sum(diff * diff, axis=-1, keepdims=True)   # (tile_n, 1)
        dist = jnp.sqrt(sq)
        d2 = sq                               # squared distance used directly
    elif dist_flag == "l1":
        diff = x0 - x1 + 1e-6
        dist = jnp.sum(jnp.abs(diff), axis=-1, keepdims=True)
        d2 = dist * dist
    elif dist_flag == "cos":
        eps = 1e-8
        dot = jnp.sum(x0 * x1, axis=-1, keepdims=True)
        s0 = jnp.sum(x0 * x0, axis=-1, keepdims=True)
        s1 = jnp.sum(x1 * x1, axis=-1, keepdims=True)
        # 1/max(||x||, eps) == rsqrt(max(||x||^2, eps^2))  -> EUP, off the VALU path.
        sim = (dot
               * lax.rsqrt(jnp.maximum(s0, eps * eps))
               * lax.rsqrt(jnp.maximum(s1, eps * eps)))
        dist = 1.0 - (2.0 / math.pi) * sim
        d2 = dist * dist
    else:
        raise ValueError(f"unknown dist_flag: {dist_flag}")

    hinge = jnp.maximum(margin - dist, 0.0)
    # (1-l)*d2 + l*h^2 == d2 + l*(h^2 - d2): minimal lane-sparse (tile_n,1) tail.
    per_row = d2 + lbl * (hinge * hinge - d2)

    if need_mask:
        # Only the boundary tile contains undefined rows; the select fully
        # replaces those values, so garbage/NaN there cannot reach the sum.
        rows = pl.program_id(0) * tile_n + lax.broadcasted_iota(
            jnp.int32, per_row.shape, 0)
        per_row = jnp.where(rows < n_valid, per_row, 0.0)

    # Per-tile partial sum; each grid step owns its own output block, so the
    # grid axis is fully parallel (megacore-shardable on v7x).
    out_ref[...] = jnp.sum(per_row, axis=0, keepdims=True).reshape(1, 1, 1)


def _choose_tile_n(n, d, dtype):
    itemsize = jnp.dtype(dtype).itemsize
    sub = _sublane_multiple(dtype)
    # VMEM bytes per row of ONE pipeline buffer:
    #   x0 + x1 blocks             : 2 * d * itemsize
    #   label block (lane-padded to 128 lanes of f32)
    row_bytes = 2 * d * itemsize + 128 * 4
    # ~24 MiB for the double-buffered pipeline working set: multi-MiB input
    # DMAs (near HBM roofline) while keeping double-buffering + compute
    # temporaries under v7x's 64 MiB VMEM (48 MiB scoped limit below).
    budget = 24 * 1024 * 1024
    tile_n = budget // (2 * row_bytes)
    tile_n = max(sub, (tile_n // sub) * sub)
    # Never allocate blocks larger than the (rounded-up) problem.
    tile_n = min(tile_n, _round_up(n, sub))
    # Keep >= 2 grid steps when possible so the "parallel" axis can shard
    # across v7x's two TensorCores (no effect on v5e/v6e single-TC chips).
    if n >= 2 * sub:
        tile_n = min(tile_n, _round_up((n + 1) // 2, sub))
    return max(sub, (tile_n // sub) * sub), sub


def contrastive_loss(x0, x1, label, *, margin=2.0, dist_flag="l2", tile_n=None):
    """Pallas equivalent of ConstractiveLoss.forward. Returns scalar f32."""
    n, d = x0.shape
    itemsize = jnp.dtype(x0.dtype).itemsize

    auto_tile, sub = _choose_tile_n(n, d, x0.dtype)
    if tile_n is None:
        tile_n = auto_tile
    else:
        tile_n = max(sub, (int(tile_n) // sub) * sub)
        tile_n = min(tile_n, _round_up(n, sub))

    num_tiles = pl.cdiv(n, tile_n)
    need_mask = (n % tile_n) != 0

    # Single tiny coefficient stream; no padding of the big N x D inputs.
    label2d = label.reshape(n, 1).astype(jnp.float32)

    kernel = functools.partial(
        _contrastive_loss_kernel,
        margin=float(margin), dist_flag=dist_flag,
        n_valid=n, tile_n=tile_n, need_mask=need_mask)

    # Advisory cost hint: this op is HBM-bandwidth bound.
    flops = 6 * n * d + 10 * n
    transcendentals = {"l2": n, "l1": 0, "cos": 2 * n}[dist_flag]
    bytes_accessed = 2 * n * d * itemsize + n * 4 + num_tiles * 4

    partials = pl.pallas_call(
        kernel,
        out_shape=jax.ShapeDtypeStruct((num_tiles, 1, 1), jnp.float32),
        grid_spec=pltpu.PrefetchScalarGridSpec(
            num_scalar_prefetch=0,
            grid=(num_tiles,),
            in_specs=[
                pl.BlockSpec((tile_n, d), lambda i: (i, 0)),
                pl.BlockSpec((tile_n, d), lambda i: (i, 0)),
                pl.BlockSpec((tile_n, 1), lambda i: (i, 0)),
            ],
            out_specs=pl.BlockSpec((1, 1, 1), lambda i: (i, 0, 0)),
        ),
        compiler_params=pltpu.CompilerParams(
            dimension_semantics=("parallel",),
            vmem_limit_bytes=48 * 1024 * 1024,
        ),
        cost_estimate=pl.CostEstimate(
            flops=flops,
            transcendentals=transcendentals,
            bytes_accessed=bytes_accessed),
    )(x0, x1, label2d)

    # Final reduction over per-tile partials (tiny, done in XLA).
    return jnp.sum(partials)


def _reference_loss(x0, x1, label, margin=2.0, dist_flag="l2"):
    x0 = x0.astype(jnp.float32)
    x1 = x1.astype(jnp.float32)
    label = label.astype(jnp.float32)
    if dist_flag == "l2":
        dist = jnp.sqrt(jnp.sum((x0 - x1 + 1e-6) ** 2, axis=-1))
    elif dist_flag == "l1":
        dist = jnp.sum(jnp.abs(x0 - x1 + 1e-6), axis=-1)
    else:
        eps = 1e-8
        dot = jnp.sum(x0 * x1, axis=-1)
        n0 = jnp.maximum(jnp.linalg.norm(x0, axis=-1), eps)
        n1 = jnp.maximum(jnp.linalg.norm(x1, axis=-1), eps)
        dist = 1.0 - 2.0 * (dot / (n0 * n1)) / math.pi
    hinge = jnp.maximum(margin - dist, 0.0)
    return jnp.sum((1.0 - label) * dist ** 2 + label * hinge ** 2)


if __name__ == "__main__":
    key = jax.random.PRNGKey(0)
    ok = True

    # (N, D, dtype, forced_tile_n) — exercises single-tile, multi-tile,
    # partial boundary tile (mask path), auto tile sizing, and bf16 sublanes.
    configs = [
        (8,   32,  jnp.float32,  None),  # single tile, no boundary mask
        (13,  32,  jnp.float32,  8),     # 2 tiles, partial boundary tile
        (40,  32,  jnp.float32,  16),    # 3 tiles, partial boundary tile
        (300, 64,  jnp.float32,  None),  # auto tile + megacore clamp + boundary
        (96,  128, jnp.bfloat16, None),  # bf16 path (sublane multiple of 16)
    ]

    for (N, D, dt, tn) in configs:
        k0, k1, k2, key = jax.random.split(key, 4)
        x0 = jax.random.normal(k0, (N, D), dtype=jnp.float32).astype(dt)
        x1 = jax.random.normal(k1, (N, D), dtype=jnp.float32).astype(dt)
        label = jax.random.bernoulli(k2, 0.5, (N,)).astype(jnp.float32)

        for flag in ("l2", "l1", "cos"):
            out = contrastive_loss(x0, x1, label, margin=2.0, dist_flag=flag,
                                   tile_n=tn)
            out = jax.block_until_ready(out)
            ref = _reference_loss(x0, x1, label, margin=2.0, dist_flag=flag)
            tol = 1e-3 if dt == jnp.bfloat16 else 1e-4
            if not jnp.allclose(out, ref, rtol=tol, atol=tol):
                ok = False
                print(f"MISMATCH N={N} D={D} dtype={jnp.dtype(dt).name} "
                      f"tile_n={tn} dist_flag={flag}: pallas={out} ref={ref}")

    if ok:
        print("KERNEL_OK")
</pallas_src>

<mosaic_0001>
module attributes {stable_mosaic.version = 11 : i64} {
  func.func @_contrastive_loss_kernel(%arg0: i32, %arg1: memref<8x32xf32, #tpu.memory_space<vmem>>, %arg2: memref<8x32xf32, #tpu.memory_space<vmem>>, %arg3: memref<8x1xf32, #tpu.memory_space<vmem>>, %arg4: memref<1x1x1xf32, #tpu.memory_space<vmem>>) attributes {dimension_semantics = [#tpu.dimension_semantics<parallel>], iteration_bounds = array<i64: 1>, scalar_prefetch = 0 : i64, scratch_operands = 0 : i64, tpu.core_type = #tpu.core_type<tc>, window_params = [{transform_indices = @transform_0, window_bounds = array<i64: 8, 32>}, {transform_indices = @transform_1, window_bounds = array<i64: 8, 32>}, {transform_indices = @transform_2, window_bounds = array<i64: 8, 1>}, {transform_indices = @transform_3, window_bounds = array<i64: 1, 1, 1>}]} {
    %c0 = arith.constant 0 : index
    %c0_0 = arith.constant 0 : index
    %0 = vector.load %arg1[%c0, %c0_0] : memref<8x32xf32, #tpu.memory_space<vmem>>, vector<8x32xf32>
    %c0_1 = arith.constant 0 : index
    %c0_2 = arith.constant 0 : index
    %1 = vector.load %arg2[%c0_1, %c0_2] : memref<8x32xf32, #tpu.memory_space<vmem>>, vector<8x32xf32>
    %c0_3 = arith.constant 0 : index
    %c0_4 = arith.constant 0 : index
    %2 = vector.load %arg3[%c0_3, %c0_4] : memref<8x1xf32, #tpu.memory_space<vmem>>, vector<8x1xf32>
    %3 = arith.subf %0, %1 : vector<8x32xf32>
    %cst = arith.constant 9.99999997E-7 : f32
    %4 = vector.broadcast %cst : f32 to vector<8x32xf32>
    %5 = arith.addf %3, %4 : vector<8x32xf32>
    %6 = arith.mulf %5, %5 : vector<8x32xf32>
    %cst_5 = arith.constant dense<0.000000e+00> : vector<8xf32>
    %7 = vector.multi_reduction <add>, %6, %cst_5 [1] : vector<8x32xf32> to vector<8xf32>
    %8 = vector.shape_cast %7 : vector<8xf32> to vector<8x1xf32>
    %9 = math.sqrt %8 : vector<8x1xf32>
    %cst_6 = arith.constant 2.000000e+00 : f32
    %10 = vector.broadcast %cst_6 : f32 to vector<8x1xf32>
    %11 = arith.subf %10, %9 : vector<8x1xf32>
    %cst_7 = arith.constant 0.000000e+00 : f32
    %12 = vector.broadcast %cst_7 : f32 to vector<8x1xf32>
    %13 = arith.maximumf %11, %12 : vector<8x1xf32>
    %14 = arith.mulf %13, %13 : vector<8x1xf32>
    %15 = arith.subf %14, %8 : vector<8x1xf32>
    %16 = arith.mulf %2, %15 : vector<8x1xf32>
    %17 = arith.addf %8, %16 : vector<8x1xf32>
    %cst_8 = arith.constant dense<0.000000e+00> : vector<1xf32>
    %18 = vector.multi_reduction <add>, %17, %cst_8 [0] : vector<8x1xf32> to vector<1xf32>
    %19 = vector.shape_cast %18 : vector<1xf32> to vector<1x1xf32>
    %20 = vector.shape_cast %19 : vector<1x1xf32> to vector<1x1x1xf32>
    %c0_9 = arith.constant 0 : index
    %c0_10 = arith.constant 0 : index
    %c0_11 = arith.constant 0 : index
    %21 = vector.load %arg4[%c0_9, %c0_10, %c0_11] : memref<1x1x1xf32, #tpu.memory_space<vmem>>, vector<1x1x1xf32>
    tpu.vector_store %arg4[%c0_9, %c0_10, %c0_11], %20 {strides = array<i32>} : memref<1x1x1xf32, #tpu.memory_space<vmem>>, vector<1x1x1xf32>,
    return
  }
  func.func @transform_0(%arg0: i32) -> (i32, i32) {
    %c0_i32 = arith.constant 0 : i32
    %c0_i32_0 = arith.constant 0 : i32
    return %arg0, %c0_i32 : i32, i32
  }
  func.func @transform_1(%arg0: i32) -> (i32, i32) {
    %c0_i32 = arith.constant 0 : i32
    %c0_i32_0 = arith.constant 0 : i32
    return %arg0, %c0_i32 : i32, i32
  }
  func.func @transform_2(%arg0: i32) -> (i32, i32) {
    %c0_i32 = arith.constant 0 : i32
    %c0_i32_0 = arith.constant 0 : i32
    return %arg0, %c0_i32 : i32, i32
  }
  func.func @transform_3(%arg0: i32) -> (i32, i32, i32) {
    %c0_i32 = arith.constant 0 : i32
    %c0_i32_0 = arith.constant 0 : i32
    %c0_i32_1 = arith.constant 0 : i32
    return %arg0, %c0_i32, %c0_i32_0 : i32, i32, i32
  }
}

</mosaic_0001>

<llo_original>
// kernel: tpu_custom_call.1
$region0: #{tpu_custom_call.1}
  #allocation0 [shape = 'u32[]', space=smem, size = 0x4, offset = 0x4, fixed_abs, tag = 'smem constant byte address 0x4 - core index']
  #allocation1 [shape = 'u32[72,128]{1,0:T(1,128)}', space=vmem, size = 0x9000, scoped, tag = 'internal scratch']
  %s0 = inlined_call_operand.vmem [shape: f32[8,32], index: 0, kind: input, shape index: {}]
  %s1 = inlined_call_operand.hbm [shape: f32[8,32], index: 1, kind: input, shape index: {}]
  %s2 = inlined_call_operand.vmem [shape: f32[8,1], index: 2, kind: input, shape index: {}]
  %s3 = inlined_call_operand.hbm [shape: f32[1,1,1], index: 3, kind: output, shape index: {}]
  %s4 = sld [smem:[#allocation0]]
  $region26: #{tpu_custom_call.1} parent=0
    _
  %s6 = ssub.s32 1, %s4
  %s7 = scalar_select 0, %s6, %s4
  $region1: #{tpu_custom_call.1} parent=0
    #allocation2 [shape = 'u8[4096]{0}', space=vmem, size = 0x1000, scoped, tag = 'input window, operand 1, single buffered']
    #allocation3 [shape = 's32[1]{0}', space=sflag, size = 0x4, scoped, tag = 'scoped memory for tpu_custom_call.1']
    #allocation4 [shape = 's32[1]{0}', space=sflag, size = 0x4, scoped, tag = 'scoped memory for tpu_custom_call.1']
    #allocation5 [shape = 'u8[512]{0}', space=vmem, size = 0x400, scoped, tag = 'output window, operand 0, single buffered']
    %8 = vsyncpa [#allocation3], 0
    %9 = vsyncpa [#allocation4], 0
    // Predicated region
    $region2: #{tpu_custom_call.1} parent=1 // pred_check
      _
    $region3: #{tpu_custom_call.1} parent=1 // pred_check_branch
      %11 = sbr.rel (0) target = $region5
    $region4: #{tpu_custom_call.1} parent=1 // pred_region
      _
    $region5: #{tpu_custom_call.1} parent=1 // pred_fallthru
      _
    // Predicated region
    $region6: #{tpu_custom_call.1} parent=1 // pred_check
      _
    $region7: #{tpu_custom_call.1} parent=1 // pred_check_branch
      %13 = sbr.rel (0) target = $region9
    $region8: #{tpu_custom_call.1} parent=1 // pred_region
      %15 = vsyncadd [#allocation3], 0
      %s17 = sshll.u32 %s1, 4
      %s18 = int_to_ptr.hbm [resolvable:$true] %s17
      %s19 = sshll.u32 [#allocation2], 4
      %s20 = int_to_ptr.vmem [resolvable:$true] %s19
      %22 = dma.hbm_to_vmem [thread:$0]  %s18, 128, %s20, [#allocation3]
    $region9: #{tpu_custom_call.1} parent=1 // pred_fallthru
      _
    // Predicated region
    $region10: #{tpu_custom_call.1} parent=1 // pred_check
      _
    $region11: #{tpu_custom_call.1} parent=1 // pred_check_branch
      %24 = sbr.rel (0) target = $region13
    $region12: #{tpu_custom_call.1} parent=1 // pred_region
      _
    $region13: #{tpu_custom_call.1} parent=1 // pred_fallthru
      _
    // Predicated region
    $region14: #{tpu_custom_call.1} parent=1 // pred_check
      _
    $region15: #{tpu_custom_call.1} parent=1 // pred_check_branch
      %26 = sbr.rel (0) target = $region17
    $region16: #{tpu_custom_call.1} parent=1 // pred_region
      %28 = dma.done [#allocation3], 128
    $region17: #{tpu_custom_call.1} parent=1 // pred_fallthru
      _
    %v29 = vld [vmem:[%s0] sm:$0xff]
    %v30 = vld [vmem:[#allocation2] sm:$0xff]
    %v31 = vld [vmem:[%s2] sm:$0xff]
    %v32 = vsub.f32 %v29, %v30
    %v33 = vadd.f32 %v32, 1e-06
    %v34 = vmul.f32 %v33, %v33
    %vm35 = vcmask 261120
    %v36 = vsel %vm35, %v34, 0.0
    %37 = vadd.xlane.f32.xlu0 %v36
    %v38 = vpop.xlane.xlu0 %37
    %v39 = vrsqrt.pop %v38
    %v40 = vmul.f32 %v39, %v38
    %v41 = vmul.f32 %v40, %v39
    %v42 = vmul.f32 0.5, %v41
    %v43 = vsub.f32 1.5, %v42
    %v44 = vmul.f32 %v39, %v43
    %v45 = vmul.f32 %v38, %v44
    %vm46 = vcmp.eq.f32.partialorder %v38, inf
    %v47 = vsel %vm46, %v38, %v45
    %vm48 = vcmp.eq.f32.partialorder %v38, 0.0
    %v49 = vand.u32 %v38, 2147483648
    %v50 = vsel %vm48, %v49, %v47
    %v51 = vsub.f32 2.0, %v50
    %v52 = vmax.f32 %v51, 0.0
    %v53 = vmul.f32 %v52, %v52
    %v54 = vsub.f32 %v53, %v38
    %v55 = vmul.f32 %v31, %v54
    %v56 = vadd.f32 %v38, %v55
    %vm57 = vcmask 7168
    %v58 = vsel %vm57, %v56, 0.0
    %v59 = vrot.slane %v58, 4
    %v60 = vadd.f32 %v58, %v59
    %v61 = vrot.slane %v60, 2
    %v62 = vadd.f32 %v60, %v61
    %v63 = vrot.slane %v62, 1
    %v64 = vadd.f32 %v62, %v63
    %vm65 = vcmask 0
    %66 = vst.msk [vmem:[#allocation5] sm:$0x1] %vm65, %v64
    // Predicated region
    $region18: #{tpu_custom_call.1} parent=1 // pred_check
      _
    $region19: #{tpu_custom_call.1} parent=1 // pred_check_branch
      %68 = sbr.rel (0) target = $region21
    $region20: #{tpu_custom_call.1} parent=1 // pred_region
      %70 = vsyncadd [#allocation4], 0
      %s72 = sshll.u32 [#allocation5], 4
      %s73 = int_to_ptr.vmem [resolvable:$true] %s72
      %s74 = sshll.u32 %s3, 4
      %s75 = int_to_ptr.hbm [resolvable:$true] %s74
      %77 = dma.vmem_to_hbm [thread:$0]  %s73, 16, %s75, [#allocation4]
    $region21: #{tpu_custom_call.1} parent=1 // pred_fallthru
      _
    // Predicated region
    $region22: #{tpu_custom_call.1} parent=1 // pred_check
      _
    $region23: #{tpu_custom_call.1} parent=1 // pred_check_branch
      %79 = sbr.rel (0) target = $region25
    $region24: #{tpu_custom_call.1} parent=1 // pred_region
      %81 = dma.done [#allocation4], 16
    $region25: #{tpu_custom_call.1} parent=1 // pred_fallthru
      _
    %82 = vsyncpa [#allocation3], 1
    %83 = vsyncpa [#allocation4], 1

</llo_original>
